<compile_context>
chip_gen: v7x
topology: tpu7x:2x2x1
jax: 0.10.0
libtpu: 0.0.40
codegen_flags: <defaults>
</compile_context>

<pallas_src>
import functools
import math

import jax
import jax.numpy as jnp
from jax import lax
from jax.experimental import pallas as pl
from jax.experimental.pallas import tpu as pltpu


def _round_up(x, m):
    return ((x + m - 1) // m) * m


def _vmem_capacity_bytes():
    """Per-core VMEM capacity; conservative 64 MiB (v7x) fallback."""
    try:
        info = pltpu.get_tpu_info()
        cap = getattr(info, "vmem_capacity_bytes", None)
        if cap:
            return int(cap)
    except Exception:
        pass
    return 64 * 1024 * 1024


def _gelu(h, approximate):
    if approximate:
        # tanh approx routes the transcendental to the EUP slot (v7x relief).
        return jax.nn.gelu(h, approximate=True)
    # exact erf-based GELU: matches PyTorch nn.GELU() default semantics.
    return 0.5 * h * (1.0 + lax.erf(h * (1.0 / math.sqrt(2.0))))


# ----------------------------------------------------------------------------
# Kernels
# ----------------------------------------------------------------------------
def _adapter_kernel_resident(x_ref, w1_ref, b1_ref, w2_ref, b2_ref, o_ref, *,
                             approximate):
    # x streamed at native dtype; cast in VMEM (VPU filler hidden under MXU).
    x = x_ref[...].astype(w1_ref.dtype)
    h = jnp.dot(x, w1_ref[...], preferred_element_type=jnp.float32)
    h = h + b1_ref[...]
    h = _gelu(h, approximate)
    out = jnp.dot(h.astype(w2_ref.dtype), w2_ref[...],
                  preferred_element_type=jnp.float32)
    out = out + b2_ref[...]
    o_ref[...] = out.astype(o_ref.dtype)


def _adapter_kernel_ntiled(x_ref, w1_ref, b1_ref, w2_ref, b2_ref, o_ref, h_ref,
                           *, approximate):
    # Grid = (rows i, linear2-output-columns j), j innermost ("arbitrary").
    # h is computed once per row tile and kept in VMEM scratch across j.
    @pl.when(pl.program_id(1) == 0)
    def _():
        x = x_ref[...].astype(w1_ref.dtype)
        h = jnp.dot(x, w1_ref[...], preferred_element_type=jnp.float32)
        h = h + b1_ref[...]
        h_ref[...] = _gelu(h, approximate).astype(h_ref.dtype)

    out = jnp.dot(h_ref[...], w2_ref[...], preferred_element_type=jnp.float32)
    out = out + b2_ref[...]
    o_ref[...] = out.astype(o_ref.dtype)


# ----------------------------------------------------------------------------
# One-time parameter preparation (hoisted out of the per-call forward)
# ----------------------------------------------------------------------------
def prepare_image_adapter_params(w1, b1, w2, b2, *, compute_dtype=jnp.bfloat16):
    """Pad feature dims to lane-dense multiples of 128 and cast matmul operands
    to the MXU compute dtype, ONCE.  Weights stored as [in, out] (transposed
    vs. PyTorch's nn.Linear [out, in]).  Zero padding is exact: padded w1
    columns / b1 entries are 0, GELU(0)=0, padded w2 rows/cols / b2 entries
    are 0, and padded outputs are sliced off."""
    F_in, F_out = w1.shape
    F_in_p = _round_up(F_in, 128)
    F_pad = _round_up(F_out, 128)
    if F_in_p != F_in:
        w1 = jnp.pad(w1, ((0, F_in_p - F_in), (0, 0)))
    if F_pad != F_out:
        pf = F_pad - F_out
        w1 = jnp.pad(w1, ((0, 0), (0, pf)))
        b1 = jnp.pad(b1, ((0, pf),))
        w2 = jnp.pad(w2, ((0, pf), (0, pf)))
        b2 = jnp.pad(b2, ((0, pf),))
    return dict(
        w1=w1.astype(compute_dtype),
        b1=b1.reshape(1, F_pad).astype(jnp.float32),
        w2=w2.astype(compute_dtype),
        b2=b2.reshape(1, F_pad).astype(jnp.float32),
        F_in=F_in, F_in_p=F_in_p, F_out=F_out, F_pad=F_pad,
        compute_dtype=compute_dtype,
    )


# ----------------------------------------------------------------------------
# Forward
# ----------------------------------------------------------------------------
def image_adapter_forward(vision_outputs, params, *, tile_m=None, tile_n=None,
                          out_dtype=None, gelu_approximate=False, path="auto"):
    """vision_outputs: [B, S, F_in] -> [B, S, F_out]."""
    B, S, F_in = vision_outputs.shape
    assert F_in == params["F_in"], "input feature dim mismatch with params"
    F_in_p, F_out, F_pad = params["F_in_p"], params["F_out"], params["F_pad"]
    compute_dtype = params["compute_dtype"]
    w1, b1, w2, b2 = params["w1"], params["b1"], params["w2"], params["b2"]
    if out_dtype is None:
        out_dtype = vision_outputs.dtype          # bf16 halves writeback traffic
    M = B * S

    xsz = jnp.dtype(vision_outputs.dtype).itemsize
    csz = jnp.dtype(compute_dtype).itemsize
    osz = jnp.dtype(out_dtype).itemsize

    vmem_cap = _vmem_capacity_bytes()             # per-core (v7x: 64 MiB)
    vmem_budget = int(vmem_cap * 0.9)

    # w1 + w2 + biases fully resident (Buffered(1) -> single copy).
    resident_w_bytes = (F_in_p * F_pad + F_pad * F_pad) * csz + 2 * F_pad * 4
    if path == "auto":
        path = "resident" if resident_w_bytes <= 0.7 * vmem_budget else "ntiled"

    # ---- choose TN (column-tiled fallback only) ----------------------------
    if path == "ntiled":
        TN = 512 if tile_n is None else tile_n
        while TN > 128 and (F_pad % TN) != 0:
            TN //= 2
        if F_pad % TN != 0:
            TN = 128
    else:
        TN = F_pad

    # ---- VMEM estimate (what the compiler actually allocates) --------------
    def est(TM):
        if path == "resident":
            stream = 2 * TM * F_in_p * xsz + 2 * TM * F_pad * osz   # x/out dbl-buf
            temps = TM * F_in_p * csz + TM * F_pad * (4 + csz + 4)  # x bf16, h f32/bf16, out f32
            return resident_w_bytes + stream + temps
        resident = F_in_p * F_pad * csz + F_pad * 4                 # w1, b1 (Buffered(1))
        stream = (2 * TM * F_in_p * xsz + 2 * TM * TN * osz
                  + 2 * F_pad * TN * csz + 2 * TN * 4)              # x, out, w2, b2
        scratch = TM * F_pad * csz                                  # persistent h
        temps = TM * F_in_p * csz + TM * F_pad * 4 + TM * TN * 4
        return resident + stream + scratch + temps

    # ---- choose TM from the remaining per-core VMEM budget -----------------
    if tile_m is None:
        TM = 1024
        while TM > 256 and est(TM) > vmem_budget:
            TM //= 2
    else:
        TM = tile_m
    TM = max(8, min(TM, _round_up(M, 8)))
    TM = (TM // 8) * 8
    M_pad = _round_up(M, TM)

    # x stays in its native dtype (cast inside the kernel).  Padding is only
    # applied when the row count or K dim is misaligned (no-op for typical
    # vision dims like 1152 / 1408 and row counts that are multiples of TM).
    x2d = vision_outputs.reshape(M, F_in)
    if M_pad != M or F_in_p != F_in:
        x2d = jnp.pad(x2d, ((0, M_pad - M), (0, F_in_p - F_in)))

    vmem_bytes = est(TM)
    vmem_limit = min(int(vmem_cap * 0.95),
                     max(32 * 1024 * 1024, int(vmem_bytes * 1.25)))

    cost = pl.CostEstimate(
        flops=2 * M_pad * F_pad * (F_in_p + F_pad),
        transcendentals=M_pad * F_pad,
        bytes_accessed=(M_pad * F_in_p * xsz + M_pad * F_pad * osz
                        + (F_in_p * F_pad + F_pad * F_pad) * csz),
    )

    if path == "resident":
        grid = (M_pad // TM,)
        kernel = functools.partial(_adapter_kernel_resident,
                                   approximate=gelu_approximate)
        out2d = pl.pallas_call(
            kernel,
            out_shape=jax.ShapeDtypeStruct((M_pad, F_pad), out_dtype),
            grid_spec=pltpu.PrefetchScalarGridSpec(
                num_scalar_prefetch=0,
                grid=grid,
                in_specs=[
                    # streamed rows (double-buffered by default)
                    pl.BlockSpec((TM, F_in_p), lambda i: (i, 0)),
                    # resident operands: fetched once, single buffer
                    pl.BlockSpec((F_in_p, F_pad), lambda i: (0, 0),
                                 pipeline_mode=pl.Buffered(1)),
                    pl.BlockSpec((1, F_pad), lambda i: (0, 0),
                                 pipeline_mode=pl.Buffered(1)),
                    pl.BlockSpec((F_pad, F_pad), lambda i: (0, 0),
                                 pipeline_mode=pl.Buffered(1)),
                    pl.BlockSpec((1, F_pad), lambda i: (0, 0),
                                 pipeline_mode=pl.Buffered(1)),
                ],
                out_specs=pl.BlockSpec((TM, F_pad), lambda i: (i, 0)),
            ),
            compiler_params=pltpu.CompilerParams(
                dimension_semantics=("parallel",),   # megacore row-shard (v7x)
                vmem_limit_bytes=vmem_limit),
            cost_estimate=cost,
        )(x2d, w1, b1, w2, b2)
    else:
        # Column-tiled fallback: w2 too large to keep resident (v7x, big F).
        grid = (M_pad // TM, F_pad // TN)
        kernel = functools.partial(_adapter_kernel_ntiled,
                                   approximate=gelu_approximate)
        out2d = pl.pallas_call(
            kernel,
            out_shape=jax.ShapeDtypeStruct((M_pad, F_pad), out_dtype),
            grid_spec=pltpu.PrefetchScalarGridSpec(
                num_scalar_prefetch=0,
                grid=grid,
                in_specs=[
                    pl.BlockSpec((TM, F_in_p), lambda i, j: (i, 0)),   # rows
                    pl.BlockSpec((F_in_p, F_pad), lambda i, j: (0, 0),  # resident w1
                                 pipeline_mode=pl.Buffered(1)),
                    pl.BlockSpec((1, F_pad), lambda i, j: (0, 0),       # resident b1
                                 pipeline_mode=pl.Buffered(1)),
                    pl.BlockSpec((F_pad, TN), lambda i, j: (0, j)),     # streamed w2 cols
                    pl.BlockSpec((1, TN), lambda i, j: (0, j)),         # streamed b2
                ],
                out_specs=pl.BlockSpec((TM, TN), lambda i, j: (i, j)),
                scratch_shapes=[pltpu.VMEM((TM, F_pad), compute_dtype)],  # persistent h
            ),
            compiler_params=pltpu.CompilerParams(
                dimension_semantics=("parallel", "arbitrary"),
                vmem_limit_bytes=vmem_limit),
            cost_estimate=cost,
        )(x2d, w1, b1, w2, b2)

    return out2d[:M, :F_out].reshape(B, S, F_out)


# ----------------------------------------------------------------------------
# Init / reference
# ----------------------------------------------------------------------------
def init_image_adapter_params(key, input_features, output_features,
                              dtype=jnp.float32):
    """nn.Linear-style init (uniform +-1/sqrt(fan_in)); weights stored [in, out]."""
    k1, k2, k3, k4 = jax.random.split(key, 4)
    bound1 = 1.0 / math.sqrt(input_features)
    bound2 = 1.0 / math.sqrt(output_features)
    w1 = jax.random.uniform(k1, (input_features, output_features), dtype,
                            minval=-bound1, maxval=bound1)
    b1 = jax.random.uniform(k2, (output_features,), dtype,
                            minval=-bound1, maxval=bound1)
    w2 = jax.random.uniform(k3, (output_features, output_features), dtype,
                            minval=-bound2, maxval=bound2)
    b2 = jax.random.uniform(k4, (output_features,), dtype,
                            minval=-bound2, maxval=bound2)
    return w1, b1, w2, b2


def _reference_forward(x, w1, b1, w2, b2, compute_dtype=jnp.bfloat16):
    """Pure-JAX reference mirroring the kernel's dtype path (bf16 matmul
    operands, f32 accumulation / bias / exact-erf GELU)."""
    out_dtype = x.dtype
    h = jnp.dot(x.astype(compute_dtype), w1.astype(compute_dtype),
                preferred_element_type=jnp.float32) + b1.astype(jnp.float32)
    h = 0.5 * h * (1.0 + lax.erf(h / math.sqrt(2.0)))
    out = jnp.dot(h.astype(compute_dtype), w2.astype(compute_dtype),
                  preferred_element_type=jnp.float32) + b2.astype(jnp.float32)
    return out.astype(out_dtype)


if __name__ == "__main__":
    key = jax.random.PRNGKey(0)
    k_x, k_p, k_x2, k_p2 = jax.random.split(key, 4)

    # --- test 1: small shapes, resident-weight (default) path ---------------
    B, S, F_in, F_out = 2, 8, 32, 64
    x = jax.random.normal(k_x, (B, S, F_in), dtype=jnp.float32)
    w1, b1, w2, b2 = init_image_adapter_params(k_p, F_in, F_out)
    params = prepare_image_adapter_params(w1, b1, w2, b2)   # one-time prep

    out = jax.block_until_ready(image_adapter_forward(x, params))
    ref = _reference_forward(x, w1, b1, w2, b2)
    assert out.shape == (B, S, F_out)
    assert jnp.allclose(out, ref, atol=1e-2, rtol=1e-2), (
        float(jnp.max(jnp.abs(out - ref))))

    # --- test 2: force the column-tiled fallback (large-F / v7x) path -------
    F_out2 = 256
    x2 = jax.random.normal(k_x2, (B, S, F_in), dtype=jnp.float32)
    w1b, b1b, w2b, b2b = init_image_adapter_params(k_p2, F_in, F_out2)
    params2 = prepare_image_adapter_params(w1b, b1b, w2b, b2b)

    out2 = jax.block_until_ready(
        image_adapter_forward(x2, params2, path="ntiled", tile_n=128))
    ref2 = _reference_forward(x2, w1b, b1b, w2b, b2b)
    assert out2.shape == (B, S, F_out2)
    assert jnp.allclose(out2, ref2, atol=1e-2, rtol=1e-2), (
        float(jnp.max(jnp.abs(out2 - ref2))))

    print("KERNEL_OK")
</pallas_src>

<mosaic_0001>
module attributes {stable_mosaic.version = 11 : i64} {
  func.func @_adapter_kernel_resident(%arg0: i32, %arg1: memref<16x128xf32, #tpu.memory_space<vmem>>, %arg2: memref<128x128xbf16, #tpu.memory_space<vmem>>, %arg3: memref<1x128xf32, #tpu.memory_space<vmem>>, %arg4: memref<128x128xbf16, #tpu.memory_space<vmem>>, %arg5: memref<1x128xf32, #tpu.memory_space<vmem>>, %arg6: memref<16x128xf32, #tpu.memory_space<vmem>>) attributes {dimension_semantics = [#tpu.dimension_semantics<parallel>], iteration_bounds = array<i64: 1>, scalar_prefetch = 0 : i64, scratch_operands = 0 : i64, tpu.core_type = #tpu.core_type<tc>, window_params = [{transform_indices = @transform_0, window_bounds = array<i64: 16, 128>}, {pipeline_mode = #tpu.pipeline_mode<synchronous>, transform_indices = @transform_1, window_bounds = array<i64: 128, 128>}, {pipeline_mode = #tpu.pipeline_mode<synchronous>, transform_indices = @transform_2, window_bounds = array<i64: 1, 128>}, {pipeline_mode = #tpu.pipeline_mode<synchronous>, transform_indices = @transform_3, window_bounds = array<i64: 128, 128>}, {pipeline_mode = #tpu.pipeline_mode<synchronous>, transform_indices = @transform_4, window_bounds = array<i64: 1, 128>}, {transform_indices = @transform_5, window_bounds = array<i64: 16, 128>}]} {
    %c0 = arith.constant 0 : index
    %c0_0 = arith.constant 0 : index
    %0 = vector.load %arg1[%c0, %c0_0] : memref<16x128xf32, #tpu.memory_space<vmem>>, vector<16x128xf32>
    %1 = arith.truncf %0 : vector<16x128xf32> to vector<16x128xbf16>
    %c0_1 = arith.constant 0 : index
    %c0_2 = arith.constant 0 : index
    %2 = vector.load %arg2[%c0_1, %c0_2] : memref<128x128xbf16, #tpu.memory_space<vmem>>, vector<128x128xbf16>
    %cst = arith.constant dense<0.000000e+00> : vector<16x128xf32>
    %3 = tpu.matmul %1, %2, %cst {dimension_numbers = #tpu.dot_dimension_numbers<[1], [0], [0], [1], [0, 0, 1, 1], [], []>} : vector<16x128xbf16>, vector<128x128xbf16>, vector<16x128xf32> -> vector<16x128xf32>
    %c0_3 = arith.constant 0 : index
    %c0_4 = arith.constant 0 : index
    %4 = vector.load %arg3[%c0_3, %c0_4] : memref<1x128xf32, #tpu.memory_space<vmem>>, vector<1x128xf32>
    %5 = vector.broadcast %4 : vector<1x128xf32> to vector<16x128xf32>
    %6 = arith.addf %3, %5 : vector<16x128xf32>
    %cst_5 = arith.constant 5.000000e-01 : f32
    %7 = vector.broadcast %cst_5 : f32 to vector<16x128xf32>
    %8 = arith.mulf %7, %6 : vector<16x128xf32>
    %cst_6 = arith.constant 0.707106769 : f32
    %9 = vector.broadcast %cst_6 : f32 to vector<16x128xf32>
    %10 = arith.mulf %6, %9 : vector<16x128xf32>
    %11 = math.erf %10 : vector<16x128xf32>
    %cst_7 = arith.constant 1.000000e+00 : f32
    %12 = vector.broadcast %cst_7 : f32 to vector<16x128xf32>
    %13 = arith.addf %12, %11 : vector<16x128xf32>
    %14 = arith.mulf %8, %13 : vector<16x128xf32>
    %15 = arith.truncf %14 : vector<16x128xf32> to vector<16x128xbf16>
    %c0_8 = arith.constant 0 : index
    %c0_9 = arith.constant 0 : index
    %16 = vector.load %arg4[%c0_8, %c0_9] : memref<128x128xbf16, #tpu.memory_space<vmem>>, vector<128x128xbf16>
    %cst_10 = arith.constant dense<0.000000e+00> : vector<16x128xf32>
    %17 = tpu.matmul %15, %16, %cst_10 {dimension_numbers = #tpu.dot_dimension_numbers<[1], [0], [0], [1], [0, 0, 1, 1], [], []>} : vector<16x128xbf16>, vector<128x128xbf16>, vector<16x128xf32> -> vector<16x128xf32>
    %c0_11 = arith.constant 0 : index
    %c0_12 = arith.constant 0 : index
    %18 = vector.load %arg5[%c0_11, %c0_12] : memref<1x128xf32, #tpu.memory_space<vmem>>, vector<1x128xf32>
    %19 = vector.broadcast %18 : vector<1x128xf32> to vector<16x128xf32>
    %20 = arith.addf %17, %19 : vector<16x128xf32>
    %c0_13 = arith.constant 0 : index
    %c0_14 = arith.constant 0 : index
    %21 = vector.load %arg6[%c0_13, %c0_14] : memref<16x128xf32, #tpu.memory_space<vmem>>, vector<16x128xf32>
    tpu.vector_store %arg6[%c0_13, %c0_14], %20 {strides = array<i32>} : memref<16x128xf32, #tpu.memory_space<vmem>>, vector<16x128xf32>,
    return
  }
  func.func @transform_0(%arg0: i32) -> (i32, i32) {
    %c0_i32 = arith.constant 0 : i32
    %c0_i32_0 = arith.constant 0 : i32
    return %arg0, %c0_i32 : i32, i32
  }
  func.func @transform_1(%arg0: i32) -> (i32, i32) {
    %c0_i32 = arith.constant 0 : i32
    %c0_i32_0 = arith.constant 0 : i32
    %c0_i32_1 = arith.constant 0 : i32
    return %c0_i32, %c0_i32_0 : i32, i32
  }
  func.func @transform_2(%arg0: i32) -> (i32, i32) {
    %c0_i32 = arith.constant 0 : i32
    %c0_i32_0 = arith.constant 0 : i32
    %c0_i32_1 = arith.constant 0 : i32
    return %c0_i32, %c0_i32_0 : i32, i32
  }
  func.func @transform_3(%arg0: i32) -> (i32, i32) {
    %c0_i32 = arith.constant 0 : i32
    %c0_i32_0 = arith.constant 0 : i32
    %c0_i32_1 = arith.constant 0 : i32
    return %c0_i32, %c0_i32_0 : i32, i32
  }
  func.func @transform_4(%arg0: i32) -> (i32, i32) {
    %c0_i32 = arith.constant 0 : i32
    %c0_i32_0 = arith.constant 0 : i32
    %c0_i32_1 = arith.constant 0 : i32
    return %c0_i32, %c0_i32_0 : i32, i32
  }
  func.func @transform_5(%arg0: i32) -> (i32, i32) {
    %c0_i32 = arith.constant 0 : i32
    %c0_i32_0 = arith.constant 0 : i32
    return %arg0, %c0_i32 : i32, i32
  }
}

</mosaic_0001>

<llo_original>
// kernel: tpu_custom_call.1
$region0: #{tpu_custom_call.1}
  #allocation0 [shape = 'u32[]', space=smem, size = 0x4, offset = 0x4, fixed_abs, tag = 'smem constant byte address 0x4 - core index']
  #allocation1 [shape = 'u32[144,128]{1,0:T(1,128)}', space=vmem, size = 0x12000, scoped, tag = 'internal scratch']
  %s0 = inlined_call_operand.hbm [shape: f32[16,128], index: 0, kind: input, shape index: {}]
  %s1 = inlined_call_operand.hbm [shape: bf16[128,128], index: 1, kind: input, shape index: {}]
  %s2 = inlined_call_operand.vmem [shape: f32[1,128], index: 2, kind: input, shape index: {}]
  %s3 = inlined_call_operand.hbm [shape: bf16[128,128], index: 3, kind: input, shape index: {}]
  %s4 = inlined_call_operand.vmem [shape: f32[1,128], index: 4, kind: input, shape index: {}]
  %s5 = inlined_call_operand.hbm [shape: f32[16,128], index: 5, kind: output, shape index: {}]
  %s6 = sld [smem:[#allocation0]]
  $region42: #{tpu_custom_call.1} parent=0
    _
  %s8 = ssub.s32 1, %s6
  %s9 = scalar_select 0, %s8, %s6
  $region1: #{tpu_custom_call.1} parent=0
    #allocation2 [shape = 'u8[8192]{0}', space=vmem, size = 0x2000, scoped, tag = 'input window, operand 0, single buffered']
    #allocation3 [shape = 's32[1]{0}', space=sflag, size = 0x4, scoped, tag = 'scoped memory for tpu_custom_call.1']
    #allocation4 [shape = 's32[1]{0}', space=sflag, size = 0x4, scoped, tag = 'scoped memory for tpu_custom_call.1']
    #allocation5 [shape = 'u8[32768]{0}', space=vmem, size = 0x8000, scoped, tag = 'input window, operand 1, single buffered']
    #allocation6 [shape = 's32[1]{0}', space=sflag, size = 0x4, scoped, tag = 'scoped memory for tpu_custom_call.1']
    #allocation7 [shape = 'u8[32768]{0}', space=vmem, size = 0x8000, scoped, tag = 'input window, operand 3, single buffered']
    #allocation8 [shape = 'u8[8192]{0}', space=vmem, size = 0x2000, scoped, tag = 'output window, operand 0, single buffered']
    %10 = vsyncpa [#allocation3], 0
    %11 = vsyncpa [#allocation6], 0
    %12 = vsyncpa [#allocation4], 0
    // Predicated region
    $region2: #{tpu_custom_call.1} parent=1 // pred_check
      _
    $region3: #{tpu_custom_call.1} parent=1 // pred_check_branch
      %14 = sbr.rel (0) target = $region5
    $region4: #{tpu_custom_call.1} parent=1 // pred_region
      %s16 = ssub.s32 256, 256
      %17 = vsyncadd [#allocation3], %s16
      %s18 = sshll.u32 [#allocation2], 4
      %s19 = int_to_ptr.vmem [resolvable:$true] %s18
      %24 = dma.hbm_to_vmem [thread:$0]  %s0, 256, %s19, [#allocation3], 128, 128, 8
    $region5: #{tpu_custom_call.1} parent=1 // pred_fallthru
      _
    // Predicated region
    $region6: #{tpu_custom_call.1} parent=1 // pred_check
      _
    $region7: #{tpu_custom_call.1} parent=1 // pred_check_branch
      %26 = sbr.rel (0) target = $region9
    $region8: #{tpu_custom_call.1} parent=1 // pred_region
      %s28 = ssub.s32 1024, 1024
      %29 = vsyncadd [#allocation6], %s28
      %s30 = sshll.u32 [#allocation5], 4
      %s31 = int_to_ptr.vmem [resolvable:$true] %s30
      %36 = dma.hbm_to_vmem [thread:$0]  %s1, 1024, %s31, [#allocation6], 64, 64, 4
    $region9: #{tpu_custom_call.1} parent=1 // pred_fallthru
      _
    // Predicated region
    $region10: #{tpu_custom_call.1} parent=1 // pred_check
      _
    $region11: #{tpu_custom_call.1} parent=1 // pred_check_branch
      %38 = sbr.rel (0) target = $region13
    $region12: #{tpu_custom_call.1} parent=1 // pred_region
      _
    $region13: #{tpu_custom_call.1} parent=1 // pred_fallthru
      _
    // Predicated region
    $region14: #{tpu_custom_call.1} parent=1 // pred_check
      _
    $region15: #{tpu_custom_call.1} parent=1 // pred_check_branch
      %40 = sbr.rel (0) target = $region17
    $region16: #{tpu_custom_call.1} parent=1 // pred_region
      %s42 = ssub.s32 1024, 1024
      %43 = vsyncadd [#allocation6], %s42
      %s44 = sshll.u32 [#allocation7], 4
      %s45 = int_to_ptr.vmem [resolvable:$true] %s44
      %50 = dma.hbm_to_vmem [thread:$0]  %s3, 1024, %s45, [#allocation6], 64, 64, 4
    $region17: #{tpu_custom_call.1} parent=1 // pred_fallthru
      _
    // Predicated region
    $region18: #{tpu_custom_call.1} parent=1 // pred_check
      _
    $region19: #{tpu_custom_call.1} parent=1 // pred_check_branch
      %52 = sbr.rel (0) target = $region21
    $region20: #{tpu_custom_call.1} parent=1 // pred_region
      _
    $region21: #{tpu_custom_call.1} parent=1 // pred_fallthru
      _
    // Predicated region
    $region22: #{tpu_custom_call.1} parent=1 // pred_check
      _
    $region23: #{tpu_custom_call.1} parent=1 // pred_check_branch
      %54 = sbr.rel (0) target = $region25
    $region24: #{tpu_custom_call.1} parent=1 // pred_region
      %55 = dma.done [#allocation3], 256
    $region25: #{tpu_custom_call.1} parent=1 // pred_fallthru
      _
    // Predicated region
    $region26: #{tpu_custom_call.1} parent=1 // pred_check
      _
    $region27: #{tpu_custom_call.1} parent=1 // pred_check_branch
      %57 = sbr.rel (0) target = $region29
    $region28: #{tpu_custom_call.1} parent=1 // pred_region
      %58 = dma.done [#allocation6], 1024
    $region29: #{tpu_custom_call.1} parent=1 // pred_fallthru
      _
    // Predicated region
    $region30: #{tpu_custom_call.1} parent=1 // pred_check
      _
    $region31: #{tpu_custom_call.1} parent=1 // pred_check_branch
      %60 = sbr.rel (0) target = $region33
    $region32: #{tpu_custom_call.1} parent=1 // pred_region
      %61 = dma.done [#allocation6], 1024
    $region33: #{tpu_custom_call.1} parent=1 // pred_fallthru
      _
    %v63 = vld [vmem:[#allocation2] sm:$0xff]
    %v64 = vld [vmem:[#allocation2 + $0x8] sm:$0xff]
    %v65 = vpack.c.bf16 %v64, %v63
    %v66 = vld [vmem:[#allocation5] sm:$0xf]
    %v67 = vld [vmem:[#allocation5 + $0x4] sm:$0xf]
    %v68 = vld [vmem:[#allocation5 + $0x8] sm:$0xf]
    %v69 = vld [vmem:[#allocation5 + $0xc] sm:$0xf]
    %v70 = vld [vmem:[#allocation5 + $0x10] sm:$0xf]
    %v71 = vld [vmem:[#allocation5 + $0x14] sm:$0xf]
    %v72 = vld [vmem:[#allocation5 + $0x18] sm:$0xf]
    %v73 = vld [vmem:[#allocation5 + $0x1c] sm:$0xf]
    %v74 = vld [vmem:[#allocation5 + $0x20] sm:$0xf]
    %v75 = vld [vmem:[#allocation5 + $0x24] sm:$0xf]
    %v76 = vld [vmem:[#allocation5 + $0x28] sm:$0xf]
    %v77 = vld [vmem:[#allocation5 + $0x2c] sm:$0xf]
    %v78 = vld [vmem:[#allocation5 + $0x30] sm:$0xf]
    %v79 = vld [vmem:[#allocation5 + $0x34] sm:$0xf]
    %v80 = vld [vmem:[#allocation5 + $0x38] sm:$0xf]
    %v81 = vld [vmem:[#allocation5 + $0x3c] sm:$0xf]
    %v82 = vld [vmem:[%s2] sm:$0x1]
    %v84 = vlaneseq
    %v85 = vshrl.u32 %v84, 7
    %v86 = vsub.s32 0, %v85
    %v87 = vrot.slane %v82, %v86
    %v105 = vunpack.c.l.b16 %v66
    %v106 = vunpack.c.l.b16 %v67
    %v107 = vunpack.c.l.b16 %v68
    %v108 = vunpack.c.l.b16 %v69
    %v109 = vunpack.c.l.b16 %v70
    %v110 = vunpack.c.l.b16 %v71
    %v111 = vunpack.c.l.b16 %v72
    %v112 = vunpack.c.l.b16 %v73
    %v113 = vunpack.c.l.b16 %v74
    %v114 = vunpack.c.l.b16 %v75
    %v115 = vunpack.c.l.b16 %v76
    %v116 = vunpack.c.l.b16 %v77
    %v117 = vunpack.c.l.b16 %v78
    %v118 = vunpack.c.l.b16 %v79
    %v119 = vunpack.c.l.b16 %v80
    %v120 = vunpack.c.l.b16 %v81
    %v121 = vpack.c.b16 %v106, %v105
    %v122 = vpack.c.b16 %v108, %v107
    %v123 = vpack.c.b16 %v110, %v109
    %v124 = vpack.c.b16 %v112, %v111
    %v125 = vpack.c.b16 %v114, %v113
    %v126 = vpack.c.b16 %v116, %v115
    %v127 = vpack.c.b16 %v118, %v117
    %v128 = vpack.c.b16 %v120, %v119
    %137 = vmatprep.subr.bf16.mxu0 0
    %138 = vmatpush1.bf16.msra.mxu0 %v121
    %139 = vmatprep.subr.bf16.mxu0 0
    %140 = vmatpush1.bf16.msra.mxu0 %v122
    %141 = vmatprep.subr.bf16.mxu0 0
    %142 = vmatpush1.bf16.msra.mxu0 %v123
    %143 = vmatprep.subr.bf16.mxu0 0
    %144 = vmatpush1.bf16.msra.mxu0 %v124
    %145 = vmatprep.subr.bf16.mxu0 0
    %146 = vmatpush1.bf16.msra.mxu0 %v125
    %147 = vmatprep.subr.bf16.mxu0 0
    %148 = vmatpush1.bf16.msra.mxu0 %v126
    %149 = vmatprep.subr.bf16.mxu0 0
    %150 = vmatpush1.bf16.msra.mxu0 %v127
    %151 = vmatprep.subr.bf16.mxu0 0
    %152 = vmatpush1.bf16.msra.mxu0 %v128
    %153 = vmatprep.subr.bf16.mxu0 0
    %154 = vmatpush1.bf16.msra.mxu0 0
    %155 = vmatprep.subr.bf16.mxu0 0
    %156 = vmatpush1.bf16.msra.mxu0 0
    %157 = vmatprep.subr.bf16.mxu0 0
    %158 = vmatpush1.bf16.msra.mxu0 0
    %159 = vmatprep.subr.bf16.mxu0 0
    %160 = vmatpush1.bf16.msra.mxu0 0
    %161 = vmatprep.subr.bf16.mxu0 0
    %162 = vmatpush1.bf16.msra.mxu0 0
    %163 = vmatprep.subr.bf16.mxu0 0
    %164 = vmatpush1.bf16.msra.mxu0 0
    %165 = vmatprep.subr.bf16.mxu0 0
    %166 = vmatpush1.bf16.msra.mxu0 0
    %167 = vmatprep.subr.bf16.mxu0 0
    %168 = vmatpush1.bf16.msra.mxu0 0
    %169 = vmatprep.mubr.bf16.mxu0 0
    %170 = vmatmul.mubr.bf16.gmra.mrb[0].mxu0 %v65
    %v171 = vpop.f32.mrb[0].mxu0
    %v172 = vadd.f32 %v87, %v171
    %v173 = vpop.f32.mrb[0].mxu0
    %v174 = vpop.f32.mrb[0].mxu0
    %v175 = vadd.f32 %v87, %v174
    %v176 = vpop.f32.mrb[0].mxu0
    %177 = vdwg.mxu0
    %v178 = vmul.f32 %v172, 0.5
    %v179 = vmul.f32 %v175, 0.5
    %v180 = vmul.f32 %v172, 0.70710677
    %v181 = vmul.f32 %v175, 0.70710677
    %v182 = verf.f32.pop %v180
    %v183 = verf.f32.pop %v181
    %v184 = vadd.f32 %v182, 1.0
    %v185 = vadd.f32 %v183, 1.0
    %v186 = vmul.f32 %v178, %v184
    %v187 = vmul.f32 %v179, %v185
    %v188 = vpack.c.bf16 %v187, %v186
    %v189 = vld [vmem:[#allocation7] sm:$0xf]
    %v190 = vld [vmem:[#allocation7 + $0x4] sm:$0xf]
    %v191 = vld [vmem:[#allocation7 + $0x8] sm:$0xf]
    %v192 = vld [vmem:[#allocation7 + $0xc] sm:$0xf]
    %v193 = vld [vmem:[#allocation7 + $0x10] sm:$0xf]
    %v194 = vld [vmem:[#allocation7 + $0x14] sm:$0xf]
    %v195 = vld [vmem:[#allocation7 + $0x18] sm:$0xf]
    %v196 = vld [vmem:[#allocation7 + $0x1c] sm:$0xf]
    %v197 = vld [vmem:[#allocation7 + $0x20] sm:$0xf]
    %v198 = vld [vmem:[#allocation7 + $0x24] sm:$0xf]
    %v199 = vld [vmem:[#allocation7 + $0x28] sm:$0xf]
    %v200 = vld [vmem:[#allocation7 + $0x2c] sm:$0xf]
    %v201 = vld [vmem:[#allocation7 + $0x30] sm:$0xf]
    %v202 = vld [vmem:[#allocation7 + $0x34] sm:$0xf]
    %v203 = vld [vmem:[#allocation7 + $0x38] sm:$0xf]
    %v204 = vld [vmem:[#allocation7 + $0x3c] sm:$0xf]
    %v205 = vld [vmem:[%s4] sm:$0x1]
    %v207 = vlaneseq
    %v208 = vshrl.u32 %v207, 7
    %v209 = vsub.s32 0, %v208
    %v210 = vrot.slane %v205, %v209
    %v228 = vunpack.c.l.b16 %v189
    %v229 = vunpack.c.l.b16 %v190
    %v230 = vunpack.c.l.b16 %v191
    %v231 = vunpack.c.l.b16 %v192
    %v232 = vunpack.c.l.b16 %v193
    %v233 = vunpack.c.l.b16 %v194
    %v234 = vunpack.c.l.b16 %v195
    %v235 = vunpack.c.l.b16 %v196
    %v236 = vunpack.c.l.b16 %v197
    %v237 = vunpack.c.l.b16 %v198
    %v238 = vunpack.c.l.b16 %v199
    %v239 = vunpack.c.l.b16 %v200
    %v240 = vunpack.c.l.b16 %v201
    %v241 = vunpack.c.l.b16 %v202
    %v242 = vunpack.c.l.b16 %v203
    %v243 = vunpack.c.l.b16 %v204
    %v244 = vpack.c.b16 %v229, %v228
    %v245 = vpack.c.b16 %v231, %v230
    %v246 = vpack.c.b16 %v233, %v232
    %v247 = vpack.c.b16 %v235, %v234
    %v248 = vpack.c.b16 %v237, %v236
    %v249 = vpack.c.b16 %v239, %v238
    %v250 = vpack.c.b16 %v241, %v240
    %v251 = vpack.c.b16 %v243, %v242
    %260 = vmatprep.subr.bf16.mxu0 0
    %261 = vmatpush1.bf16.msra.mxu0 %v244
    %262 = vmatprep.subr.bf16.mxu0 0
    %263 = vmatpush1.bf16.msra.mxu0 %v245
    %264 = vmatprep.subr.bf16.mxu0 0
    %265 = vmatpush1.bf16.msra.mxu0 %v246
    %266 = vmatprep.subr.bf16.mxu0 0
    %267 = vmatpush1.bf16.msra.mxu0 %v247
    %268 = vmatprep.subr.bf16.mxu0 0
    %269 = vmatpush1.bf16.msra.mxu0 %v248
    %270 = vmatprep.subr.bf16.mxu0 0
    %271 = vmatpush1.bf16.msra.mxu0 %v249
    %272 = vmatprep.subr.bf16.mxu0 0
    %273 = vmatpush1.bf16.msra.mxu0 %v250
    %274 = vmatprep.subr.bf16.mxu0 0
    %275 = vmatpush1.bf16.msra.mxu0 %v251
    %276 = vmatprep.subr.bf16.mxu0 0
    %277 = vmatpush1.bf16.msra.mxu0 0
    %278 = vmatprep.subr.bf16.mxu0 0
    %279 = vmatpush1.bf16.msra.mxu0 0
    %280 = vmatprep.subr.bf16.mxu0 0
    %281 = vmatpush1.bf16.msra.mxu0 0
    %282 = vmatprep.subr.bf16.mxu0 0
    %283 = vmatpush1.bf16.msra.mxu0 0
    %284 = vmatprep.subr.bf16.mxu0 0
    %285 = vmatpush1.bf16.msra.mxu0 0
    %286 = vmatprep.subr.bf16.mxu0 0
    %287 = vmatpush1.bf16.msra.mxu0 0
    %288 = vmatprep.subr.bf16.mxu0 0
    %289 = vmatpush1.bf16.msra.mxu0 0
    %290 = vmatprep.subr.bf16.mxu0 0
    %291 = vmatpush1.bf16.msra.mxu0 0
    %292 = vmatprep.mubr.bf16.mxu0 0
    %293 = vmatmul.mubr.bf16.gmra.mrb[0].mxu0 %v188
    %v294 = vpop.f32.mrb[0].mxu0
    %v295 = vadd.f32 %v210, %v294
    %v296 = vpop.f32.mrb[0].mxu0
    %v297 = vpop.f32.mrb[0].mxu0
    %v298 = vadd.f32 %v210, %v297
    %v299 = vpop.f32.mrb[0].mxu0
    %300 = vdwg.mxu0
    %301 = vst [vmem:[#allocation8] sm:$0xff] %v295
    %302 = vst [vmem:[#allocation8 + $0x8] sm:$0xff] %v298
    // Predicated region
    $region34: #{tpu_custom_call.1} parent=1 // pred_check
      _
    $region35: #{tpu_custom_call.1} parent=1 // pred_check_branch
      %304 = sbr.rel (0) target = $region37
    $region36: #{tpu_custom_call.1} parent=1 // pred_region
      %s306 = ssub.s32 256, 256
      %307 = vsyncadd [#allocation4], %s306
      %s308 = sshll.u32 [#allocation8], 4
      %s309 = int_to_ptr.vmem [resolvable:$true] %s308
      %314 = dma.vmem_to_hbm [thread:$0]  %s309, 256, %s5, [#allocation4], 128, 128, 8
    $region37: #{tpu_custom_call.1} parent=1 // pred_fallthru
      _
    // Predicated region
    $region38: #{tpu_custom_call.1} parent=1 // pred_check
      _
    $region39: #{tpu_custom_call.1} parent=1 // pred_check_branch
      %316 = sbr.rel (0) target = $region41
    $region40: #{tpu_custom_call.1} parent=1 // pred_region
      %317 = dma.done [#allocation4], 256
    $region41: #{tpu_custom_call.1} parent=1 // pred_fallthru
      _
    %318 = vsyncpa [#allocation3], 1
    %319 = vsyncpa [#allocation6], 1
    %320 = vsyncpa [#allocation4], 1

</llo_original>
